<compile_context>
chip_gen: v7x
topology: tpu7x:2x2x1
jax: 0.10.0
libtpu: 0.0.40
codegen_flags: <defaults>
</compile_context>

<pallas_src>
import jax
import jax.numpy as jnp
from jax.experimental import pallas as pl
from jax.experimental.pallas import tpu as pltpu

_VMEM_LIMIT_BYTES = 32 * 1024 * 1024  # safe scoped limit on v5e / v6e / v7x


def _image_view(h, w):
    """Pick a (rows, lanes) 2D view of one H*W image: lane-dense if possible."""
    hw = h * w
    if hw % 128 == 0:
        return hw // 128, 128
    return h, w


def _reduce_kernel(sx_ref, psum_ref, psumsq_ref):
    # sx_ref: (R, L) spatial-domain tile of one (batch, channel) image.
    sx = sx_ref[...].astype(jnp.float32)
    row_s = jnp.sum(sx, axis=-1, keepdims=True)            # (R, 1)  lane reduce
    row_s2 = jnp.sum(sx * sx, axis=-1, keepdims=True)      # (R, 1)
    psum_ref[...] = jnp.sum(row_s, axis=0, keepdims=True)      # (1, 1)
    psumsq_ref[...] = jnp.sum(row_s2, axis=0, keepdims=True)   # (1, 1)


def _normalize_kernel(scale_ref, bias_ref, x_ref, o_ref):
    # scale/bias: (C,) f32 scalars in SMEM; x_ref: (R, L) frequency-domain tile.
    c = pl.program_id(0)
    x = x_ref[...].astype(jnp.float32)          # cast in-VMEM (free if already f32)
    o_ref[...] = (x * scale_ref[c] + bias_ref[c]).astype(o_ref.dtype)


def fbatchnorm2d_forward(x, gamma, beta, running_mean, running_var,
                         momentum=0.8, epsilon=1e-5, training=True):
    """Forward pass of FBatchnorm2d.

    Returns (normalized_x [N,C,H,W], new_running_mean [C], new_running_var [C]).
    """
    N, C, H, W = x.shape
    R, L = _image_view(H, W)
    x4 = x.reshape(N, C, R, L)          # free row-major reshape, no transpose

    cparams = pltpu.CompilerParams(
        dimension_semantics=("parallel", "parallel"),
        vmem_limit_bytes=_VMEM_LIMIT_BYTES)

    if training:
        # TODO(synk): torch.fft.ifft2 has no Pallas primitive; jnp.fft as glue.
        sx4 = jnp.fft.ifft2(x, axes=(-2, -1)).real.astype(jnp.float32)
        sx4 = sx4.reshape(N, C, R, L)

        # Phase 1: per-(channel, batch) partial sum / sum-of-squares.
        psum, psumsq = pl.pallas_call(
            _reduce_kernel,
            out_shape=(jax.ShapeDtypeStruct((C, N, 1, 1), jnp.float32),
                       jax.ShapeDtypeStruct((C, N, 1, 1), jnp.float32)),
            grid=(C, N),
            in_specs=[pl.BlockSpec((None, None, R, L),
                                   lambda c, n: (n, c, 0, 0))],
            out_specs=(pl.BlockSpec((None, None, 1, 1),
                                    lambda c, n: (c, n, 0, 0)),
                       pl.BlockSpec((None, None, 1, 1),
                                    lambda c, n: (c, n, 0, 0))),
            compiler_params=cparams,
        )(sx4)

        # Tiny final combine + momentum update on C-sized arrays (negligible).
        count = float(N * H * W)
        s = jnp.sum(psum.reshape(C, N), axis=1)
        s2 = jnp.sum(psumsq.reshape(C, N), axis=1)
        mean = s / count
        var = jnp.maximum(s2 / count - mean * mean, 0.0)   # biased, guarded
        rm_new = running_mean.astype(jnp.float32) * momentum + (1.0 - momentum) * mean
        rv_new = running_var.astype(jnp.float32) * momentum + (1.0 - momentum) * var
    else:
        # Eval mode: no ifft2, no stats pass, stats unchanged.
        rm_new = running_mean.astype(jnp.float32)
        rv_new = running_var.astype(jnp.float32)

    # Fold the per-channel affine: out = x * scale[c] + bias[c].
    scale = gamma.astype(jnp.float32) / jnp.sqrt(rv_new + epsilon)
    bias = beta.astype(jnp.float32) - scale * rm_new

    # Phase 2: normalize, tiled per (channel, batch) image.
    out4 = pl.pallas_call(
        _normalize_kernel,
        out_shape=jax.ShapeDtypeStruct((N, C, R, L), x.dtype),
        grid=(C, N),
        in_specs=[pl.BlockSpec(memory_space=pltpu.MemorySpace.SMEM),
                  pl.BlockSpec(memory_space=pltpu.MemorySpace.SMEM),
                  pl.BlockSpec((None, None, R, L),
                               lambda c, n: (n, c, 0, 0))],
        out_specs=pl.BlockSpec((None, None, R, L),
                               lambda c, n: (n, c, 0, 0)),
        compiler_params=cparams,
    )(scale, bias, x4)

    return out4.reshape(N, C, H, W), rm_new, rv_new


if __name__ == "__main__":
    key = jax.random.PRNGKey(0)
    # channels = 3 so the reference's hard-coded reshape(3, -1) is exactly
    # per-channel flattening.
    N, C, H, W = 2, 3, 16, 16
    x = jax.random.normal(key, (N, C, H, W), dtype=jnp.float32)

    gamma = jnp.ones((C,), jnp.float32)
    beta = jnp.zeros((C,), jnp.float32)
    running_mean = jnp.zeros((C,), jnp.float32)
    running_var = jnp.ones((C,), jnp.float32)

    out, rm, rv = fbatchnorm2d_forward(
        x, gamma, beta, running_mean, running_var,
        momentum=0.8, epsilon=1e-5, training=True)
    jax.block_until_ready((out, rm, rv))

    # Pure-JAX reference check (mirrors the PyTorch module).
    sx = jnp.fft.ifft2(x, axes=(-2, -1)).real
    sx2 = jnp.transpose(sx, (1, 0, 2, 3)).reshape(C, -1)
    mean_ref = jnp.mean(sx2, axis=-1)
    var_ref = jnp.mean((sx2 - mean_ref[:, None]) ** 2, axis=-1)
    rm_ref = running_mean * 0.8 + 0.2 * mean_ref
    rv_ref = running_var * 0.8 + 0.2 * var_ref
    out_ref = (gamma[None, :, None, None]
               * (x - rm_ref[None, :, None, None])
               / jnp.sqrt(rv_ref[None, :, None, None] + 1e-5)
               + beta[None, :, None, None])

    assert jnp.allclose(rm, rm_ref, rtol=1e-4, atol=1e-6)
    assert jnp.allclose(rv, rv_ref, rtol=1e-3, atol=1e-6)
    assert jnp.allclose(out, out_ref, rtol=1e-3, atol=1e-5)
    print("KERNEL_OK")
</pallas_src>

<mosaic_0001>
module attributes {stable_mosaic.version = 11 : i64} {
  func.func @_reduce_kernel(%arg0: i32, %arg1: i32, %arg2: memref<1x1x2x128xf32, #tpu.memory_space<vmem>>, %arg3: memref<1x1x1x1xf32, #tpu.memory_space<vmem>>, %arg4: memref<1x1x1x1xf32, #tpu.memory_space<vmem>>) attributes {dimension_semantics = [#tpu.dimension_semantics<parallel>, #tpu.dimension_semantics<parallel>], iteration_bounds = array<i64: 3, 2>, scalar_prefetch = 0 : i64, scratch_operands = 0 : i64, tpu.core_type = #tpu.core_type<tc>, window_params = [{transform_indices = @transform_0, window_bounds = array<i64: 1, 1, 2, 128>}, {transform_indices = @transform_1, window_bounds = array<i64: 1, 1, 1, 1>}, {transform_indices = @transform_2, window_bounds = array<i64: 1, 1, 1, 1>}]} {
    %c0 = arith.constant 0 : index
    %c0_0 = arith.constant 0 : index
    %c0_1 = arith.constant 0 : index
    %c0_2 = arith.constant 0 : index
    %0 = vector.load %arg2[%c0, %c0_0, %c0_1, %c0_2] : memref<1x1x2x128xf32, #tpu.memory_space<vmem>>, vector<1x1x2x128xf32>
    %1 = vector.shape_cast %0 : vector<1x1x2x128xf32> to vector<2x128xf32>
    %cst = arith.constant dense<0.000000e+00> : vector<2xf32>
    %2 = vector.multi_reduction <add>, %1, %cst [1] : vector<2x128xf32> to vector<2xf32>
    %3 = vector.shape_cast %2 : vector<2xf32> to vector<2x1xf32>
    %4 = arith.mulf %1, %1 : vector<2x128xf32>
    %cst_3 = arith.constant dense<0.000000e+00> : vector<2xf32>
    %5 = vector.multi_reduction <add>, %4, %cst_3 [1] : vector<2x128xf32> to vector<2xf32>
    %6 = vector.shape_cast %5 : vector<2xf32> to vector<2x1xf32>
    %cst_4 = arith.constant dense<0.000000e+00> : vector<1xf32>
    %7 = vector.multi_reduction <add>, %3, %cst_4 [0] : vector<2x1xf32> to vector<1xf32>
    %8 = vector.shape_cast %7 : vector<1xf32> to vector<1x1xf32>
    %c0_5 = arith.constant 0 : index
    %c0_6 = arith.constant 0 : index
    %c0_7 = arith.constant 0 : index
    %c0_8 = arith.constant 0 : index
    %9 = vector.load %arg3[%c0_5, %c0_6, %c0_7, %c0_8] : memref<1x1x1x1xf32, #tpu.memory_space<vmem>>, vector<1x1x1x1xf32>
    %10 = vector.shape_cast %9 : vector<1x1x1x1xf32> to vector<1x1xf32>
    %11 = vector.shape_cast %8 : vector<1x1xf32> to vector<1x1x1x1xf32>
    tpu.vector_store %arg3[%c0_5, %c0_6, %c0_7, %c0_8], %11 {strides = array<i32>} : memref<1x1x1x1xf32, #tpu.memory_space<vmem>>, vector<1x1x1x1xf32>,
    %cst_9 = arith.constant dense<0.000000e+00> : vector<1xf32>
    %12 = vector.multi_reduction <add>, %6, %cst_9 [0] : vector<2x1xf32> to vector<1xf32>
    %13 = vector.shape_cast %12 : vector<1xf32> to vector<1x1xf32>
    %c0_10 = arith.constant 0 : index
    %c0_11 = arith.constant 0 : index
    %c0_12 = arith.constant 0 : index
    %c0_13 = arith.constant 0 : index
    %14 = vector.load %arg4[%c0_10, %c0_11, %c0_12, %c0_13] : memref<1x1x1x1xf32, #tpu.memory_space<vmem>>, vector<1x1x1x1xf32>
    %15 = vector.shape_cast %14 : vector<1x1x1x1xf32> to vector<1x1xf32>
    %16 = vector.shape_cast %13 : vector<1x1xf32> to vector<1x1x1x1xf32>
    tpu.vector_store %arg4[%c0_10, %c0_11, %c0_12, %c0_13], %16 {strides = array<i32>} : memref<1x1x1x1xf32, #tpu.memory_space<vmem>>, vector<1x1x1x1xf32>,
    return
  }
  func.func @transform_0(%arg0: i32, %arg1: i32) -> (i32, i32, i32, i32) {
    %c0_i32 = arith.constant 0 : i32
    %c0_i32_0 = arith.constant 0 : i32
    %c0_i32_1 = arith.constant 0 : i32
    return %arg1, %arg0, %c0_i32, %c0_i32_0 : i32, i32, i32, i32
  }
  func.func @transform_1(%arg0: i32, %arg1: i32) -> (i32, i32, i32, i32) {
    %c0_i32 = arith.constant 0 : i32
    %c0_i32_0 = arith.constant 0 : i32
    %c0_i32_1 = arith.constant 0 : i32
    return %arg0, %arg1, %c0_i32, %c0_i32_0 : i32, i32, i32, i32
  }
  func.func @transform_2(%arg0: i32, %arg1: i32) -> (i32, i32, i32, i32) {
    %c0_i32 = arith.constant 0 : i32
    %c0_i32_0 = arith.constant 0 : i32
    %c0_i32_1 = arith.constant 0 : i32
    return %arg0, %arg1, %c0_i32, %c0_i32_0 : i32, i32, i32, i32
  }
}

</mosaic_0001>

<llo_original>
// kernel: tpu_custom_call.1
$region0: #{tpu_custom_call.1}
  #allocation0 [shape = 'u32[]', space=smem, size = 0x4, offset = 0x4, fixed_abs, tag = 'smem constant byte address 0x4 - core index']
  #allocation1 [shape = 'u32[144,128]{1,0:T(1,128)}', space=vmem, size = 0x12000, scoped, tag = 'internal scratch']
  %s0 = inlined_call_operand.hbm [shape: f32[2,3,2,128], index: 0, kind: input, shape index: {}]
  %s1 = inlined_call_operand.vmem [shape: f32[3,2,1,1], index: 1, kind: output, shape index: {0}]
  %s2 = inlined_call_operand.vmem [shape: f32[3,2,1,1], index: 2, kind: output, shape index: {1}]
  %3 = xla_tuple %s1, %s2
  %s4 = sld [smem:[#allocation0]]
  $region49: #{tpu_custom_call.1} parent=0
    _
  %s6 = ssub.s32 1, %s4
  %s7 = scalar_select 0, %s6, %s4
  $region1: #{tpu_custom_call.1} parent=0
    #allocation2 [shape = 'u8[2048]{0}', space=vmem, size = 0x800, scoped, tag = 'input window, operand 0']
    #allocation3 [shape = 's32[2]{0}', space=sflag, size = 0x8, scoped, tag = 'scoped memory for tpu_custom_call.1']
    %8 = vsyncpa [#allocation3], 0
    %s9 = scalar_lea.sflag [#allocation3], 1
    %10 = vsyncpa %s9, 0
    loop: start=0, step=1, limit=8
    $region2: #{tpu_custom_call.1} parent=1 // loop_pre_header
      _
    $region3: #{tpu_custom_call.1} parent=1 // loop_header
      %s12 = sphi 0, %s16
      %p13 = scmp.ge.s32.totalorder %s12, 8
      %s19 = sphi 0, %s31
      %s20 = sphi 0, %s27
      %s21 = sphi 0, %s19
      %s22 = sphi 0, %s20
      %s23 = sphi 0, %s21
      %s24 = sphi 0, %s22
      %s36 = sphi 0, %s38
      %s39 = sphi 0, %s36
      %s40 = sphi 0, %s39
      %s56 = sphi 0, %s40
      %s64 = sphi 0, %s66
      %s67 = sphi 0, %s64
      %s68 = sphi 0, %s67
      %s84 = sphi 0, %s68
      %s92 = sphi 0, %s94
      %s95 = sphi 0, %s92
      %s96 = sphi 0, %s95
      %s112 = sphi 0, %s96
    $region4: #{tpu_custom_call.1} parent=1 // loop_header_branch
      %15 = sbr.rel (%p13) target = $region8
    $region5: #{tpu_custom_call.1} parent=1 // loop_body
      %s17 = ssub.s32 %s12, 1
      %s18 = ssub.s32 %s12, 2
      %s25 = sadd.s32 1, %s20
      %p26 = scmp.ge.s32.totalorder %s25, 2
      %s27 = scalar_select %p26, 0, %s25
      %s28 = sadd.s32 1, %s19
      %s29 = scalar_select %p26, %s28, %s19
      %p30 = scmp.ge.s32.totalorder %s29, 3
      %s31 = scalar_select %p30, 0, %s29
      %s32 = ssub.s32 %s20, %s27
      %s33 = ssub.s32 %s19, %s31
      %s34 = sor.u32 %s32, %s33
      %p35 = scmp.eq.s32.totalorder %s34, 0
      %s37 = sadd.s32 %s36, 1
      %s38 = scalar_select %p35, %s36, %s37
      %p41 = pneg %p35
      %p42 = scmp.eq.s32.totalorder %s12, 5
      %p43 = por %p41, %p42
      %p44 = scmp.ne.s32.totalorder %s36, %s39
      %p45 = scmp.eq.s32.totalorder %s12, 0
      %p46 = por %p44, %p45
      %p47 = scmp.ne.s32.totalorder %s36, %s39
      %p48 = scmp.eq.s32.totalorder %s17, 5
      %p49 = por %p47, %p48
      %p50 = scmp.ne.s32.totalorder %s39, %s40
      %p51 = scmp.eq.s32.totalorder %s17, 0
      %p52 = por %p50, %p51
      %p53 = scmp.ne.s32.totalorder %s39, %s40
      %p54 = scmp.eq.s32.totalorder %s18, 5
      %p55 = por %p53, %p54
      %p57 = scmp.ne.s32.totalorder %s40, %s56
      %p58 = scmp.eq.s32.totalorder %s18, 0
      %p59 = por %p57, %p58
      %s60 = ssub.s32 %s19, %s31
      %s61 = ssub.s32 %s20, %s27
      %s62 = sor.u32 %s60, %s61
      %p63 = scmp.eq.s32.totalorder %s62, 0
      %s65 = sadd.s32 %s64, 1
      %s66 = scalar_select %p63, %s64, %s65
      %p69 = pneg %p63
      %p70 = scmp.eq.s32.totalorder %s12, 5
      %p71 = por %p69, %p70
      %p72 = scmp.ne.s32.totalorder %s64, %s67
      %p73 = scmp.eq.s32.totalorder %s12, 0
      %p74 = por %p72, %p73
      %p75 = scmp.ne.s32.totalorder %s64, %s67
      %p76 = scmp.eq.s32.totalorder %s17, 5
      %p77 = por %p75, %p76
      %p78 = scmp.ne.s32.totalorder %s67, %s68
      %p79 = scmp.eq.s32.totalorder %s17, 0
      %p80 = por %p78, %p79
      %p81 = scmp.ne.s32.totalorder %s67, %s68
      %p82 = scmp.eq.s32.totalorder %s18, 5
      %p83 = por %p81, %p82
      %p85 = scmp.ne.s32.totalorder %s68, %s84
      %p86 = scmp.eq.s32.totalorder %s18, 0
      %p87 = por %p85, %p86
      %s88 = ssub.s32 %s19, %s31
      %s89 = ssub.s32 %s20, %s27
      %s90 = sor.u32 %s88, %s89
      %p91 = scmp.eq.s32.totalorder %s90, 0
      %s93 = sadd.s32 %s92, 1
      %s94 = scalar_select %p91, %s92, %s93
      %p97 = pneg %p91
      %p98 = scmp.eq.s32.totalorder %s12, 5
      %p99 = por %p97, %p98
      %p100 = scmp.ne.s32.totalorder %s92, %s95
      %p101 = scmp.eq.s32.totalorder %s12, 0
      %p102 = por %p100, %p101
      %p103 = scmp.ne.s32.totalorder %s92, %s95
      %p104 = scmp.eq.s32.totalorder %s17, 5
      %p105 = por %p103, %p104
      %p106 = scmp.ne.s32.totalorder %s95, %s96
      %p107 = scmp.eq.s32.totalorder %s17, 0
      %p108 = por %p106, %p107
      %p109 = scmp.ne.s32.totalorder %s95, %s96
      %p110 = scmp.eq.s32.totalorder %s18, 5
      %p111 = por %p109, %p110
      %p113 = scmp.ne.s32.totalorder %s96, %s112
      %p114 = scmp.eq.s32.totalorder %s18, 0
      %p115 = por %p113, %p114
      %p116 = scmp.le.s32.totalorder 1, %s12
      %p117 = scmp.lt.s32.totalorder %s12, 7
      %p118 = pnand %p116, %p117
      %p119 = pneg %p118
      // Predicated region
      $region9: #{tpu_custom_call.1} parent=5 // pred_check
        _
      $region10: #{tpu_custom_call.1} parent=5 // pred_check_branch
        %121 = sbr.rel (%p118) target = $region12
      $region11: #{tpu_custom_call.1} parent=5 // pred_region
        %s122 = ssub.s32 %s12, 1
      $region12: #{tpu_custom_call.1} parent=5 // pred_fallthru
        _
      %p123 = scmp.lt.s32.totalorder %s12, 6
      // Predicated region
      $region13: #{tpu_custom_call.1} parent=5 // pred_check
        %p124 = pneg %p123
      $region14: #{tpu_custom_call.1} parent=5 // pred_check_branch
        %126 = sbr.rel (%p124) target = $region16
      $region15: #{tpu_custom_call.1} parent=5 // pred_region
        // Predicated region
        $region17: #{tpu_custom_call.1} parent=15 // pred_check
          %p127 = pneg %p46
        $region18: #{tpu_custom_call.1} parent=15 // pred_check_branch
          %129 = sbr.rel (%p127) target = $region20
        $region19: #{tpu_custom_call.1} parent=15 // pred_region
          %s130 = sand.u32 %s36, 1
          %s131 = scalar_lea.sflag [#allocation3], %s130
          %s132 = sand.u32 %s36, 1
          %s133 = smul.addr %s132, 2
          %s134 = scalar_lea.vmem [#allocation2], %s133
          %s136 = ssub.s32 32, 32
          %137 = vsyncadd %s131, %s136
          %s138 = smul.addr %s20, 3
          %s139 = sadd.s32 %s19, %s138
          %s140 = smul.addr %s139, 32
          %s141 = scalar_lea.hbm %s0, %s140
          %s143 = sshll.u32 %s134, 4
          %s144 = int_to_ptr.vmem [resolvable:$true] %s143
          %146 = dma.hbm_to_vmem [thread:$0]  %s141, 32, %s144, %s131
        $region20: #{tpu_custom_call.1} parent=15 // pred_fallthru
          _
      $region16: #{tpu_custom_call.1} parent=5 // pred_fallthru
        _
      %p147 = scmp.le.s32.totalorder 1, %s12
      %p148 = scmp.lt.s32.totalorder %s12, 7
      %p149 = pnand %p147, %p148
      %p150 = pneg %p149
      // Predicated region
      $region21: #{tpu_custom_call.1} parent=5 // pred_check
        _
      $region22: #{tpu_custom_call.1} parent=5 // pred_check_branch
        %152 = sbr.rel (%p149) target = $region24
      $region23: #{tpu_custom_call.1} parent=5 // pred_region
        %s153 = ssub.s32 %s12, 1
        %s154 = sand.u32 %s39, 1
        %s155 = scalar_lea.sflag [#allocation3], %s154
        %s156 = sand.u32 %s39, 1
        %s157 = smul.addr %s156, 2
        %s158 = scalar_lea.vmem [#allocation2], %s157
        // Predicated region
        $region25: #{tpu_custom_call.1} parent=23 // pred_check
          %p159 = pneg %p52
        $region26: #{tpu_custom_call.1} parent=23 // pred_check_branch
          %161 = sbr.rel (%p159) target = $region28
        $region27: #{tpu_custom_call.1} parent=23 // pred_region
          %162 = dma.done %s155, 32
        $region28: #{tpu_custom_call.1} parent=23 // pred_fallthru
          _
        %s163 = sand.u32 %s39, 1
        %s164 = scalar_lea.sflag [#allocation3], %s163
        %s165 = sand.u32 %s39, 1
        %s166 = smul.addr %s165, 2
        %s167 = scalar_lea.vmem [#allocation2], %s166
        %p168 = pneg %p52
        %p169 = pneg %p49
        %p170 = pneg %p80
        %p171 = pneg %p77
        %p172 = scmp.lt.s32.totalorder %s21, 2
        %s173 = scalar_select %p172, %s21, 2
        %p174 = scmp.lt.s32.totalorder %s22, 1
        %s175 = scalar_select %p174, %s22, 1
        %s176 = smul.addr %s173, 2
        %s177 = sadd.s32 %s175, %s176
        %s178 = scalar_lea.vmem %s1, %s177
        %p179 = pneg %p108
        %p180 = pneg %p105
        %p181 = scmp.lt.s32.totalorder %s21, 2
        %s182 = scalar_select %p181, %s21, 2
        %p183 = scmp.lt.s32.totalorder %s22, 1
        %s184 = scalar_select %p183, %s22, 1
        %s185 = smul.addr %s182, 2
        %s186 = sadd.s32 %s184, %s185
        %s187 = scalar_lea.vmem %s2, %s186
        %p188 = scmp.lt.s32.totalorder %s21, 2
        %s189 = scalar_select %p188, %s21, 2
        %p190 = scmp.lt.s32.totalorder %s22, 1
        %s191 = scalar_select %p190, %s22, 1
        %s192 = smul.addr %s189, 2
        %s193 = sadd.s32 %s191, %s192
        %s194 = scalar_lea.vmem %s1, %s193
        %p195 = scmp.lt.s32.totalorder %s21, 2
        %s196 = scalar_select %p195, %s21, 2
        %p197 = scmp.lt.s32.totalorder %s22, 1
        %s198 = scalar_select %p197, %s22, 1
        %s199 = smul.addr %s196, 2
        %s200 = sadd.s32 %s198, %s199
        %s201 = scalar_lea.vmem %s2, %s200
        %v202 = vld [vmem:[%s158] sm:$0x3]
        %vm203 = vcmask 1041408
        %v204 = vsel %vm203, %v202, 0.0
        %205 = vadd.xlane.f32.xlu0 %v204
        %v206 = vpop.xlane.xlu0 %205
        %v207 = vmul.f32 %v202, %v202
        %v208 = vsel %vm203, %v207, 0.0
        %209 = vadd.xlane.f32.xlu0 %v208
        %v210 = vpop.xlane.xlu0 %209
        %v211 = vsel %vm203, %v206, 0.0
        %v212 = vrot.slane %v211, 4
        %v213 = vadd.f32 %v211, %v212
        %v214 = vrot.slane %v213, 2
        %v215 = vadd.f32 %v213, %v214
        %v216 = vrot.slane %v215, 1
        %v217 = vadd.f32 %v215, %v216
        %vm218 = vcmask 0
        %219 = vst.msk [vmem:[%s194] sm:$0x1] %vm218, %v217
        %v220 = vsel %vm203, %v210, 0.0
        %v221 = vrot.slane %v220, 4
        %v222 = vadd.f32 %v220, %v221
        %v223 = vrot.slane %v222, 2
        %v224 = vadd.f32 %v222, %v223
        %v225 = vrot.slane %v224, 1
        %v226 = vadd.f32 %v224, %v225
        %227 = vst.msk [vmem:[%s201] sm:$0x1] %vm218, %v226
        %p228 = scmp.lt.s32.totalorder %s21, 2
        %s229 = scalar_select %p228, %s21, 2
        %p230 = scmp.lt.s32.totalorder %s22, 1
        %s231 = scalar_select %p230, %s22, 1
        %s232 = smul.addr %s229, 2
        %s233 = sadd.s32 %s231, %s232
        %s234 = scalar_lea.vmem %s1, %s233
        %p235 = scmp.lt.s32.totalorder %s21, 2
        %s236 = scalar_select %p235, %s21, 2
        %p237 = scmp.lt.s32.totalorder %s22, 1
        %s238 = scalar_select %p237, %s22, 1
        %s239 = smul.addr %s236, 2
        %s240 = sadd.s32 %s238, %s239
        %s241 = scalar_lea.vmem %s2, %s240
        // Predicated region
        $region29: #{tpu_custom_call.1} parent=23 // pred_check
          %p242 = pneg %p77
        $region30: #{tpu_custom_call.1} parent=23 // pred_check_branch
          %244 = sbr.rel (%p242) target = $region32
        $region31: #{tpu_custom_call.1} parent=23 // pred_region
          _
        $region32: #{tpu_custom_call.1} parent=23 // pred_fallthru
          _
        // Predicated region
        $region33: #{tpu_custom_call.1} parent=23 // pred_check
          %p245 = pneg %p105
        $region34: #{tpu_custom_call.1} parent=23 // pred_check_branch
          %247 = sbr.rel (%p245) target = $region36
        $region35: #{tpu_custom_call.1} parent=23 // pred_region
          _
        $region36: #{tpu_custom_call.1} parent=23 // pred_fallthru
          _
      $region24: #{tpu_custom_call.1} parent=5 // pred_fallthru
        _
      %p248 = scmp.le.s32.totalorder 2, %s12
      // Predicated region
      $region37: #{tpu_custom_call.1} parent=5 // pred_check
        %p249 = pneg %p248
      $region38: #{tpu_custom_call.1} parent=5 // pred_check_branch
        %251 = sbr.rel (%p249) target = $region40
      $region39: #{tpu_custom_call.1} parent=5 // pred_region
        %s252 = ssub.s32 %s12, 2
        // Predicated region
        $region41: #{tpu_custom_call.1} parent=39 // pred_check
          %p253 = pneg %p83
        $region42: #{tpu_custom_call.1} parent=39 // pred_check_branch
          %255 = sbr.rel (%p253) target = $region44
        $region43: #{tpu_custom_call.1} parent=39 // pred_region
          %p256 = scmp.lt.s32.totalorder %s23, 2
          %s257 = scalar_select %p256, %s23, 2
          %p258 = scmp.lt.s32.totalorder %s24, 1
          %s259 = scalar_select %p258, %s24, 1
          %s260 = smul.addr %s257, 2
          %s261 = sadd.s32 %s259, %s260
          %s262 = scalar_lea.vmem %s1, %s261
        $region44: #{tpu_custom_call.1} parent=39 // pred_fallthru
          _
        // Predicated region
        $region45: #{tpu_custom_call.1} parent=39 // pred_check
          %p263 = pneg %p111
        $region46: #{tpu_custom_call.1} parent=39 // pred_check_branch
          %265 = sbr.rel (%p263) target = $region48
        $region47: #{tpu_custom_call.1} parent=39 // pred_region
          %p266 = scmp.lt.s32.totalorder %s23, 2
          %s267 = scalar_select %p266, %s23, 2
          %p268 = scmp.lt.s32.totalorder %s24, 1
          %s269 = scalar_select %p268, %s24, 1
          %s270 = smul.addr %s267, 2
          %s271 = sadd.s32 %s269, %s270
          %s272 = scalar_lea.vmem %s2, %s271
        $region48: #{tpu_custom_call.1} parent=39 // pred_fallthru
          _
      $region40: #{tpu_custom_call.1} parent=5 // pred_fallthru
        _
    $region6: #{tpu_custom_call.1} parent=1 // loop_footer
      %s16 = sadd.s32 1, %s12
    $region7: #{tpu_custom_call.1} parent=1 // loop_footer_branch
      %11 = sbr.rel target = $region3
    $region8: #{tpu_custom_call.1} parent=1 // loop_exit
      _
    %273 = vsyncpa [#allocation3], 1
    %s274 = scalar_lea.sflag [#allocation3], 1
    %275 = vsyncpa %s274, 1

</llo_original>
